<compile_context>
chip_gen: v7x
topology: tpu7x:2x2x1
jax: 0.10.0
libtpu: 0.0.40
codegen_flags: <defaults>
</compile_context>

<pallas_src>
import functools
import math
import numpy as np

import jax
import jax.numpy as jnp
from jax.experimental import pallas as pl
from jax.experimental.pallas import tpu as pltpu

SAMPLE_RATE = 16000
N_MFCC = 40
N_FFT = 400
WIN_LENGTH = 400
HOP_LENGTH = 200            # torchaudio default: win_length // 2
N_MELS = 128
N_FREQS = N_FFT // 2 + 1    # onesided = 201
F_MIN = 0.0
F_MAX = SAMPLE_RATE / 2.0
LOG_OFFSET = 1e-6           # torchaudio log_mels offset

# lane-aligned padded sizes
K_PAD = 512                 # frame length 400 -> 512 (zero-padded, exact)
N_FREQ_PAD = 256            # onesided freqs 201 -> 256 (zero-padded, exact)
N_OUT_PAD = 128             # mfcc lanes 40 -> 128 (zero-padded, exact)

TM_MAX = 1024               # row tile: ~6.3 MiB VMEM with double-buffering,
                            # portable across v5e/v6e/v7x scoped limits


def _round_up(x, m):
    return (x + m - 1) // m * m


# ---------------- deterministic "parameter" construction (no checkpoints) ----

def _hz_to_mel(f):
    return 2595.0 * np.log10(1.0 + f / 700.0)


def _mel_to_hz(m):
    return 700.0 * (10.0 ** (m / 2595.0) - 1.0)


@functools.lru_cache(maxsize=1)
def _make_weights():
    """Build fused DFT, mel-fb and DCT matrices (padded, f32) exactly once."""
    # --- Hann-windowed real-DFT basis, fused [cos | sin], padded to (512, 512)
    window = 0.5 - 0.5 * np.cos(2.0 * np.pi * np.arange(WIN_LENGTH) / WIN_LENGTH)
    n = np.arange(N_FFT)[:, None]
    k = np.arange(N_FREQS)[None, :]
    phase = 2.0 * np.pi * ((n * k) % N_FFT) / N_FFT   # reduce mod N for accuracy
    cosw = window[:, None] * np.cos(phase)            # (400, 201)
    sinw = window[:, None] * np.sin(phase)            # (400, 201)
    dftw = np.zeros((K_PAD, 2 * N_FREQ_PAD), dtype=np.float32)
    dftw[:WIN_LENGTH, :N_FREQS] = cosw
    dftw[:WIN_LENGTH, N_FREQ_PAD:N_FREQ_PAD + N_FREQS] = sinw

    # --- torchaudio.functional.melscale_fbanks(norm=None, mel_scale='htk'),
    #     zero-padded (201, 128) -> (256, 128) on the freq axis
    all_freqs = np.linspace(0.0, SAMPLE_RATE // 2, N_FREQS)
    m_pts = np.linspace(_hz_to_mel(F_MIN), _hz_to_mel(F_MAX), N_MELS + 2)
    f_pts = _mel_to_hz(m_pts)
    f_diff = f_pts[1:] - f_pts[:-1]
    slopes = f_pts[None, :] - all_freqs[:, None]
    down = -slopes[:, :-2] / f_diff[:-1]
    up = slopes[:, 2:] / f_diff[1:]
    fb = np.maximum(0.0, np.minimum(down, up))
    fb_pad = np.zeros((N_FREQ_PAD, N_MELS), dtype=np.float32)
    fb_pad[:N_FREQS, :] = fb

    # --- torchaudio.functional.create_dct(n_mfcc, n_mels, norm='ortho'),
    #     zero-padded (128, 40) -> (128, 128) on the output axis
    nn_ = np.arange(N_MELS, dtype=np.float64)
    kk = np.arange(N_MFCC, dtype=np.float64)[:, None]
    dct = np.cos(math.pi / N_MELS * (nn_ + 0.5) * kk)   # (N_MFCC, N_MELS)
    dct[0] *= 1.0 / math.sqrt(2.0)
    dct *= math.sqrt(2.0 / N_MELS)
    dct_pad = np.zeros((N_MELS, N_OUT_PAD), dtype=np.float32)
    dct_pad[:, :N_MFCC] = dct.T

    return dftw, fb_pad, dct_pad


# ---------------- Pallas kernel ----------------------------------------------

def mfcc_kernel(frames_ref, dftw_ref, fb_ref, dct_ref, out_ref):
    # frames_ref: (TM, 512) zero-padded frames
    x = frames_ref[...]
    # single fused windowed real-DFT matmul: (TM, 512) @ (512, 512)
    y = jnp.dot(x, dftw_ref[...], preferred_element_type=jnp.float32)
    re = y[:, :N_FREQ_PAD]                    # 128-aligned slices
    im = y[:, N_FREQ_PAD:]
    spec = re * re + im * im                  # power=2 spectrogram (padded cols = 0)
    mel = jnp.dot(spec, fb_ref[...], preferred_element_type=jnp.float32)   # (TM, 128)
    logmel = jnp.log(mel + LOG_OFFSET)        # log_mels=True
    # (TM, 128) lane-dense output; cols >= N_MFCC are zero (padded DCT)
    out_ref[...] = jnp.dot(logmel, dct_ref[...], preferred_element_type=jnp.float32)


# ---------------- wrapper -----------------------------------------------------

def mfcc_forward(x):
    """x: (B, T) float32 waveform -> (B, n_frames, N_MFCC) float32."""
    B, T = x.shape
    pad = N_FFT // 2
    xp = jnp.pad(x, ((0, 0), (pad, pad)), mode="reflect")   # center=True, reflect
    n_frames = 1 + T // HOP_LENGTH
    # TODO(synk): framing could be done in-kernel via pl.ANY + manual DMA of the
    # contiguous sample span (hop = n_fft/2) to avoid this materialized gather.
    idx = jnp.arange(n_frames)[:, None] * HOP_LENGTH + jnp.arange(N_FFT)[None, :]
    frames = xp[:, idx].reshape(B * n_frames, N_FFT).astype(jnp.float32)

    rows = B * n_frames
    tm = min(TM_MAX, _round_up(rows, 8))
    rows_pad = _round_up(rows, tm)
    # zero-pad rows to a tile multiple and lanes 400 -> 512 (zeros are exact)
    frames = jnp.pad(frames, ((0, rows_pad - rows), (0, K_PAD - N_FFT)))

    dftw_np, fb_np, dct_np = _make_weights()
    dftw = jnp.asarray(dftw_np)
    fb = jnp.asarray(fb_np)
    dct = jnp.asarray(dct_np)

    grid = (rows_pad // tm,)
    cost = pl.CostEstimate(
        flops=2 * rows_pad * (K_PAD * 2 * N_FREQ_PAD
                              + N_FREQ_PAD * N_MELS
                              + N_MELS * N_OUT_PAD),
        transcendentals=rows_pad * N_MELS,
        bytes_accessed=4 * (rows_pad * K_PAD
                            + K_PAD * 2 * N_FREQ_PAD
                            + N_FREQ_PAD * N_MELS
                            + N_MELS * N_OUT_PAD
                            + rows_pad * N_OUT_PAD),
    )

    out = pl.pallas_call(
        mfcc_kernel,
        out_shape=jax.ShapeDtypeStruct((rows_pad, N_OUT_PAD), jnp.float32),
        grid=grid,
        in_specs=[
            pl.BlockSpec((tm, K_PAD), lambda i: (i, 0)),               # frames tile
            pl.BlockSpec((K_PAD, 2 * N_FREQ_PAD), lambda i: (0, 0)),   # fused DFT (resident)
            pl.BlockSpec((N_FREQ_PAD, N_MELS), lambda i: (0, 0)),      # mel fb (resident)
            pl.BlockSpec((N_MELS, N_OUT_PAD), lambda i: (0, 0)),       # DCT (resident)
        ],
        out_specs=pl.BlockSpec((tm, N_OUT_PAD), lambda i: (i, 0)),
        compiler_params=pltpu.CompilerParams(
            dimension_semantics=("parallel",),   # shards row tiles across v7x cores
        ),
        cost_estimate=cost,
    )(frames, dftw, fb, dct)

    mfcc = out[:rows, :N_MFCC].reshape(B, n_frames, N_MFCC)

    # global (x - mean) / std with unbiased std (torch defaults), hoisted out of
    # the kernel so row tiling stays correct; operates on a tiny array.
    mean = jnp.mean(mfcc)
    centered = mfcc - mean
    n_elems = mfcc.size
    var = jnp.sum(centered * centered) / (n_elems - 1)
    return centered / jnp.sqrt(var)


if __name__ == "__main__":
    key = jax.random.PRNGKey(0)
    x = jax.random.normal(key, (2, 800), dtype=jnp.float32)   # (batch=2, time=800)
    y = mfcc_forward(x)
    jax.block_until_ready(y)
    assert y.shape == (2, 1 + 800 // HOP_LENGTH, N_MFCC)      # (2, 5, 40)
    assert y.dtype == jnp.float32
    assert bool(jnp.all(jnp.isfinite(y)))
    print("KERNEL_OK")
</pallas_src>

<mosaic_0001>
module attributes {stable_mosaic.version = 11 : i64} {
  func.func @mfcc_kernel(%arg0: i32, %arg1: memref<16x512xf32, #tpu.memory_space<vmem>>, %arg2: memref<512x512xf32, #tpu.memory_space<vmem>>, %arg3: memref<256x128xf32, #tpu.memory_space<vmem>>, %arg4: memref<128x128xf32, #tpu.memory_space<vmem>>, %arg5: memref<16x128xf32, #tpu.memory_space<vmem>>) attributes {dimension_semantics = [#tpu.dimension_semantics<parallel>], iteration_bounds = array<i64: 1>, scalar_prefetch = 0 : i64, scratch_operands = 0 : i64, tpu.core_type = #tpu.core_type<tc>, window_params = [{transform_indices = @transform_0, window_bounds = array<i64: 16, 512>}, {pipeline_mode = #tpu.pipeline_mode<synchronous>, transform_indices = @transform_1, window_bounds = array<i64: 512, 512>}, {pipeline_mode = #tpu.pipeline_mode<synchronous>, transform_indices = @transform_2, window_bounds = array<i64: 256, 128>}, {pipeline_mode = #tpu.pipeline_mode<synchronous>, transform_indices = @transform_3, window_bounds = array<i64: 128, 128>}, {transform_indices = @transform_4, window_bounds = array<i64: 16, 128>}]} {
    %c0 = arith.constant 0 : index
    %c0_0 = arith.constant 0 : index
    %0 = vector.load %arg1[%c0, %c0_0] : memref<16x512xf32, #tpu.memory_space<vmem>>, vector<16x512xf32>
    %c0_1 = arith.constant 0 : index
    %c0_2 = arith.constant 0 : index
    %1 = vector.load %arg2[%c0_1, %c0_2] : memref<512x512xf32, #tpu.memory_space<vmem>>, vector<512x512xf32>
    %cst = arith.constant dense<0.000000e+00> : vector<16x512xf32>
    %2 = tpu.matmul %0, %1, %cst {dimension_numbers = #tpu.dot_dimension_numbers<[1], [0], [0], [1], [0, 0, 1, 1], [], []>} : vector<16x512xf32>, vector<512x512xf32>, vector<16x512xf32> -> vector<16x512xf32>
    %3 = vector.extract_strided_slice %2 {offsets = [0, 0], sizes = [16, 256], strides = [1, 1]} : vector<16x512xf32> to vector<16x256xf32>
    %4 = vector.extract_strided_slice %2 {offsets = [0, 256], sizes = [16, 256], strides = [1, 1]} : vector<16x512xf32> to vector<16x256xf32>
    %5 = arith.mulf %3, %3 : vector<16x256xf32>
    %6 = arith.mulf %4, %4 : vector<16x256xf32>
    %7 = arith.addf %5, %6 : vector<16x256xf32>
    %c0_3 = arith.constant 0 : index
    %c0_4 = arith.constant 0 : index
    %8 = vector.load %arg3[%c0_3, %c0_4] : memref<256x128xf32, #tpu.memory_space<vmem>>, vector<256x128xf32>
    %cst_5 = arith.constant dense<0.000000e+00> : vector<16x128xf32>
    %9 = tpu.matmul %7, %8, %cst_5 {dimension_numbers = #tpu.dot_dimension_numbers<[1], [0], [0], [1], [0, 0, 1, 1], [], []>} : vector<16x256xf32>, vector<256x128xf32>, vector<16x128xf32> -> vector<16x128xf32>
    %cst_6 = arith.constant 9.99999997E-7 : f32
    %10 = vector.broadcast %cst_6 : f32 to vector<16x128xf32>
    %11 = arith.addf %9, %10 : vector<16x128xf32>
    %12 = math.log %11 : vector<16x128xf32>
    %c0_7 = arith.constant 0 : index
    %c0_8 = arith.constant 0 : index
    %13 = vector.load %arg4[%c0_7, %c0_8] : memref<128x128xf32, #tpu.memory_space<vmem>>, vector<128x128xf32>
    %cst_9 = arith.constant dense<0.000000e+00> : vector<16x128xf32>
    %14 = tpu.matmul %12, %13, %cst_9 {dimension_numbers = #tpu.dot_dimension_numbers<[1], [0], [0], [1], [0, 0, 1, 1], [], []>} : vector<16x128xf32>, vector<128x128xf32>, vector<16x128xf32> -> vector<16x128xf32>
    %c0_10 = arith.constant 0 : index
    %c0_11 = arith.constant 0 : index
    %15 = vector.load %arg5[%c0_10, %c0_11] : memref<16x128xf32, #tpu.memory_space<vmem>>, vector<16x128xf32>
    tpu.vector_store %arg5[%c0_10, %c0_11], %14 {strides = array<i32>} : memref<16x128xf32, #tpu.memory_space<vmem>>, vector<16x128xf32>,
    return
  }
  func.func @transform_0(%arg0: i32) -> (i32, i32) {
    %c0_i32 = arith.constant 0 : i32
    %c0_i32_0 = arith.constant 0 : i32
    return %arg0, %c0_i32 : i32, i32
  }
  func.func @transform_1(%arg0: i32) -> (i32, i32) {
    %c0_i32 = arith.constant 0 : i32
    %c0_i32_0 = arith.constant 0 : i32
    %c0_i32_1 = arith.constant 0 : i32
    return %c0_i32, %c0_i32_0 : i32, i32
  }
  func.func @transform_2(%arg0: i32) -> (i32, i32) {
    %c0_i32 = arith.constant 0 : i32
    %c0_i32_0 = arith.constant 0 : i32
    %c0_i32_1 = arith.constant 0 : i32
    return %c0_i32, %c0_i32_0 : i32, i32
  }
  func.func @transform_3(%arg0: i32) -> (i32, i32) {
    %c0_i32 = arith.constant 0 : i32
    %c0_i32_0 = arith.constant 0 : i32
    %c0_i32_1 = arith.constant 0 : i32
    return %c0_i32, %c0_i32_0 : i32, i32
  }
  func.func @transform_4(%arg0: i32) -> (i32, i32) {
    %c0_i32 = arith.constant 0 : i32
    %c0_i32_0 = arith.constant 0 : i32
    return %arg0, %c0_i32 : i32, i32
  }
}

</mosaic_0001>

<llo_original>
// kernel: tpu_custom_call.1
$region0: #{tpu_custom_call.1}
  #allocation0 [shape = 'u32[]', space=smem, size = 0x4, offset = 0x4, fixed_abs, tag = 'smem constant byte address 0x4 - core index']
  #allocation1 [shape = 'u32[144,128]{1,0:T(1,128)}', space=vmem, size = 0x12000, scoped, tag = 'internal scratch']
  %s0 = inlined_call_operand.hbm [shape: f32[16,512], index: 0, kind: input, shape index: {}]
  %s1 = inlined_call_operand.hbm [shape: f32[512,512], index: 1, kind: input, shape index: {}]
  %s2 = inlined_call_operand.hbm [shape: f32[256,128], index: 2, kind: input, shape index: {}]
  %s3 = inlined_call_operand.hbm [shape: f32[128,128], index: 3, kind: input, shape index: {}]
  %s4 = inlined_call_operand.hbm [shape: f32[16,128], index: 4, kind: output, shape index: {}]
  %s5 = sld [smem:[#allocation0]]
  $region42: #{tpu_custom_call.1} parent=0
    _
  %s7 = ssub.s32 1, %s5
  %s8 = scalar_select 0, %s7, %s5
  $region1: #{tpu_custom_call.1} parent=0
    #allocation2 [shape = 'u8[32768]{0}', space=vmem, size = 0x8000, scoped, tag = 'input window, operand 0, single buffered']
    #allocation3 [shape = 's32[1]{0}', space=sflag, size = 0x4, scoped, tag = 'scoped memory for tpu_custom_call.1']
    #allocation4 [shape = 's32[1]{0}', space=sflag, size = 0x4, scoped, tag = 'scoped memory for tpu_custom_call.1']
    #allocation5 [shape = 'u8[1048576]{0}', space=vmem, size = 0x100000, scoped, tag = 'input window, operand 1, single buffered']
    #allocation6 [shape = 's32[1]{0}', space=sflag, size = 0x4, scoped, tag = 'scoped memory for tpu_custom_call.1']
    #allocation7 [shape = 'u8[131072]{0}', space=vmem, size = 0x20000, scoped, tag = 'input window, operand 2, single buffered']
    #allocation8 [shape = 'u8[65536]{0}', space=vmem, size = 0x10000, scoped, tag = 'input window, operand 3, single buffered']
    #allocation9 [shape = 's32[1]{0}', space=sflag, size = 0x4, scoped, tag = 'scoped memory for tpu_custom_call.1']
    #allocation10 [shape = 'u8[8192]{0}', space=vmem, size = 0x2000, scoped, tag = 'output window, operand 0, single buffered']
    %9 = vsyncpa [#allocation3], 0
    %10 = vsyncpa [#allocation6], 0
    %11 = vsyncpa [#allocation9], 0
    %12 = vsyncpa [#allocation4], 0
    // Predicated region
    $region2: #{tpu_custom_call.1} parent=1 // pred_check
      _
    $region3: #{tpu_custom_call.1} parent=1 // pred_check_branch
      %14 = sbr.rel (0) target = $region5
    $region4: #{tpu_custom_call.1} parent=1 // pred_region
      %s16 = ssub.s32 1024, 1024
      %17 = vsyncadd [#allocation3], %s16
      %s18 = sshll.u32 [#allocation2], 4
      %s19 = int_to_ptr.vmem [resolvable:$true] %s18
      %24 = dma.hbm_to_vmem [thread:$0]  %s0, 1024, %s19, [#allocation3], 512, 512, 32
    $region5: #{tpu_custom_call.1} parent=1 // pred_fallthru
      _
    // Predicated region
    $region6: #{tpu_custom_call.1} parent=1 // pred_check
      _
    $region7: #{tpu_custom_call.1} parent=1 // pred_check_branch
      %26 = sbr.rel (0) target = $region9
    $region8: #{tpu_custom_call.1} parent=1 // pred_region
      %s28 = ssub.s32 32768, 32768
      %29 = vsyncadd [#allocation6], %s28
      %s30 = sshll.u32 [#allocation5], 4
      %s31 = int_to_ptr.vmem [resolvable:$true] %s30
      %36 = dma.hbm_to_vmem [thread:$0]  %s1, 32768, %s31, [#allocation6], 512, 512, 32
    $region9: #{tpu_custom_call.1} parent=1 // pred_fallthru
      _
    // Predicated region
    $region10: #{tpu_custom_call.1} parent=1 // pred_check
      _
    $region11: #{tpu_custom_call.1} parent=1 // pred_check_branch
      %38 = sbr.rel (0) target = $region13
    $region12: #{tpu_custom_call.1} parent=1 // pred_region
      %s40 = ssub.s32 4096, 4096
      %41 = vsyncadd [#allocation6], %s40
      %s42 = sshll.u32 [#allocation7], 4
      %s43 = int_to_ptr.vmem [resolvable:$true] %s42
      %48 = dma.hbm_to_vmem [thread:$0]  %s2, 4096, %s43, [#allocation6], 128, 128, 8
    $region13: #{tpu_custom_call.1} parent=1 // pred_fallthru
      _
    // Predicated region
    $region14: #{tpu_custom_call.1} parent=1 // pred_check
      _
    $region15: #{tpu_custom_call.1} parent=1 // pred_check_branch
      %50 = sbr.rel (0) target = $region17
    $region16: #{tpu_custom_call.1} parent=1 // pred_region
      %s52 = ssub.s32 2048, 2048
      %53 = vsyncadd [#allocation9], %s52
      %s54 = sshll.u32 [#allocation8], 4
      %s55 = int_to_ptr.vmem [resolvable:$true] %s54
      %60 = dma.hbm_to_vmem [thread:$0]  %s3, 2048, %s55, [#allocation9], 128, 128, 8
    $region17: #{tpu_custom_call.1} parent=1 // pred_fallthru
      _
    // Predicated region
    $region18: #{tpu_custom_call.1} parent=1 // pred_check
      _
    $region19: #{tpu_custom_call.1} parent=1 // pred_check_branch
      %62 = sbr.rel (0) target = $region21
    $region20: #{tpu_custom_call.1} parent=1 // pred_region
      %63 = dma.done [#allocation3], 1024
    $region21: #{tpu_custom_call.1} parent=1 // pred_fallthru
      _
    // Predicated region
    $region22: #{tpu_custom_call.1} parent=1 // pred_check
      _
    $region23: #{tpu_custom_call.1} parent=1 // pred_check_branch
      %65 = sbr.rel (0) target = $region25
    $region24: #{tpu_custom_call.1} parent=1 // pred_region
      %66 = dma.done [#allocation6], 32768
    $region25: #{tpu_custom_call.1} parent=1 // pred_fallthru
      _
    // Predicated region
    $region26: #{tpu_custom_call.1} parent=1 // pred_check
      _
    $region27: #{tpu_custom_call.1} parent=1 // pred_check_branch
      %68 = sbr.rel (0) target = $region29
    $region28: #{tpu_custom_call.1} parent=1 // pred_region
      %69 = dma.done [#allocation6], 4096
    $region29: #{tpu_custom_call.1} parent=1 // pred_fallthru
      _
    // Predicated region
    $region30: #{tpu_custom_call.1} parent=1 // pred_check
      _
    $region31: #{tpu_custom_call.1} parent=1 // pred_check_branch
      %71 = sbr.rel (0) target = $region33
    $region32: #{tpu_custom_call.1} parent=1 // pred_region
      %72 = dma.done [#allocation9], 2048
    $region33: #{tpu_custom_call.1} parent=1 // pred_fallthru
      _
    %v73 = vld [vmem:[#allocation2] sm:$0xff]
    %v74 = vld [vmem:[#allocation2 + $0x8] sm:$0xff]
    %v75 = vld [vmem:[#allocation2 + $0x10] sm:$0xff]
    %v76 = vld [vmem:[#allocation2 + $0x18] sm:$0xff]
    %v77 = vld [vmem:[#allocation2 + $0x20] sm:$0xff]
    %v78 = vld [vmem:[#allocation2 + $0x28] sm:$0xff]
    %v79 = vld [vmem:[#allocation2 + $0x30] sm:$0xff]
    %v80 = vld [vmem:[#allocation2 + $0x38] sm:$0xff]
    %v81 = vld [vmem:[#allocation5] sm:$0xff]
    %v82 = vld [vmem:[#allocation5 + $0x8] sm:$0xff]
    %v83 = vld [vmem:[#allocation5 + $0x10] sm:$0xff]
    %v84 = vld [vmem:[#allocation5 + $0x18] sm:$0xff]
    %v85 = vld [vmem:[#allocation5 + $0x20] sm:$0xff]
    %v86 = vld [vmem:[#allocation5 + $0x28] sm:$0xff]
    %v87 = vld [vmem:[#allocation5 + $0x30] sm:$0xff]
    %v88 = vld [vmem:[#allocation5 + $0x38] sm:$0xff]
    %v89 = vld [vmem:[#allocation5 + $0x40] sm:$0xff]
    %v90 = vld [vmem:[#allocation5 + $0x48] sm:$0xff]
    %v91 = vld [vmem:[#allocation5 + $0x50] sm:$0xff]
    %v92 = vld [vmem:[#allocation5 + $0x58] sm:$0xff]
    %v93 = vld [vmem:[#allocation5 + $0x60] sm:$0xff]
    %v94 = vld [vmem:[#allocation5 + $0x68] sm:$0xff]
    %v95 = vld [vmem:[#allocation5 + $0x70] sm:$0xff]
    %v96 = vld [vmem:[#allocation5 + $0x78] sm:$0xff]
    %v97 = vld [vmem:[#allocation5 + $0x80] sm:$0xff]
    %v98 = vld [vmem:[#allocation5 + $0x88] sm:$0xff]
    %v99 = vld [vmem:[#allocation5 + $0x90] sm:$0xff]
    %v100 = vld [vmem:[#allocation5 + $0x98] sm:$0xff]
    %v101 = vld [vmem:[#allocation5 + $0xa0] sm:$0xff]
    %v102 = vld [vmem:[#allocation5 + $0xa8] sm:$0xff]
    %v103 = vld [vmem:[#allocation5 + $0xb0] sm:$0xff]
    %v104 = vld [vmem:[#allocation5 + $0xb8] sm:$0xff]
    %v105 = vld [vmem:[#allocation5 + $0xc0] sm:$0xff]
    %v106 = vld [vmem:[#allocation5 + $0xc8] sm:$0xff]
    %v107 = vld [vmem:[#allocation5 + $0xd0] sm:$0xff]
    %v108 = vld [vmem:[#allocation5 + $0xd8] sm:$0xff]
    %v109 = vld [vmem:[#allocation5 + $0xe0] sm:$0xff]
    %v110 = vld [vmem:[#allocation5 + $0xe8] sm:$0xff]
    %v111 = vld [vmem:[#allocation5 + $0xf0] sm:$0xff]
    %v112 = vld [vmem:[#allocation5 + $0xf8] sm:$0xff]
    %v113 = vld [vmem:[#allocation5 + $0x100] sm:$0xff]
    %v114 = vld [vmem:[#allocation5 + $0x108] sm:$0xff]
    %v115 = vld [vmem:[#allocation5 + $0x110] sm:$0xff]
    %v116 = vld [vmem:[#allocation5 + $0x118] sm:$0xff]
    %v117 = vld [vmem:[#allocation5 + $0x120] sm:$0xff]
    %v118 = vld [vmem:[#allocation5 + $0x128] sm:$0xff]
    %v119 = vld [vmem:[#allocation5 + $0x130] sm:$0xff]
    %v120 = vld [vmem:[#allocation5 + $0x138] sm:$0xff]
    %v121 = vld [vmem:[#allocation5 + $0x140] sm:$0xff]
    %v122 = vld [vmem:[#allocation5 + $0x148] sm:$0xff]
    %v123 = vld [vmem:[#allocation5 + $0x150] sm:$0xff]
    %v124 = vld [vmem:[#allocation5 + $0x158] sm:$0xff]
    %v125 = vld [vmem:[#allocation5 + $0x160] sm:$0xff]
    %v126 = vld [vmem:[#allocation5 + $0x168] sm:$0xff]
    %v127 = vld [vmem:[#allocation5 + $0x170] sm:$0xff]
    %v128 = vld [vmem:[#allocation5 + $0x178] sm:$0xff]
    %v129 = vld [vmem:[#allocation5 + $0x180] sm:$0xff]
    %v130 = vld [vmem:[#allocation5 + $0x188] sm:$0xff]
    %v131 = vld [vmem:[#allocation5 + $0x190] sm:$0xff]
    %v132 = vld [vmem:[#allocation5 + $0x198] sm:$0xff]
    %v133 = vld [vmem:[#allocation5 + $0x1a0] sm:$0xff]
    %v134 = vld [vmem:[#allocation5 + $0x1a8] sm:$0xff]
    %v135 = vld [vmem:[#allocation5 + $0x1b0] sm:$0xff]
    %v136 = vld [vmem:[#allocation5 + $0x1b8] sm:$0xff]
    %v137 = vld [vmem:[#allocation5 + $0x1c0] sm:$0xff]
    %v138 = vld [vmem:[#allocation5 + $0x1c8] sm:$0xff]
    %v139 = vld [vmem:[#allocation5 + $0x1d0] sm:$0xff]
    %v140 = vld [vmem:[#allocation5 + $0x1d8] sm:$0xff]
    %v141 = vld [vmem:[#allocation5 + $0x1e0] sm:$0xff]
    %v142 = vld [vmem:[#allocation5 + $0x1e8] sm:$0xff]
    %v143 = vld [vmem:[#allocation5 + $0x1f0] sm:$0xff]
    %v144 = vld [vmem:[#allocation5 + $0x1f8] sm:$0xff]
    %v145 = vld [vmem:[#allocation5 + $0x200] sm:$0xff]
    %v146 = vld [vmem:[#allocation5 + $0x208] sm:$0xff]
    %v147 = vld [vmem:[#allocation5 + $0x210] sm:$0xff]
    %v148 = vld [vmem:[#allocation5 + $0x218] sm:$0xff]
    %v149 = vld [vmem:[#allocation5 + $0x220] sm:$0xff]
    %v150 = vld [vmem:[#allocation5 + $0x228] sm:$0xff]
    %v151 = vld [vmem:[#allocation5 + $0x230] sm:$0xff]
    %v152 = vld [vmem:[#allocation5 + $0x238] sm:$0xff]
    %v153 = vld [vmem:[#allocation5 + $0x240] sm:$0xff]
    %v154 = vld [vmem:[#allocation5 + $0x248] sm:$0xff]
    %v155 = vld [vmem:[#allocation5 + $0x250] sm:$0xff]
    %v156 = vld [vmem:[#allocation5 + $0x258] sm:$0xff]
    %v157 = vld [vmem:[#allocation5 + $0x260] sm:$0xff]
    %v158 = vld [vmem:[#allocation5 + $0x268] sm:$0xff]
    %v159 = vld [vmem:[#allocation5 + $0x270] sm:$0xff]
    %v160 = vld [vmem:[#allocation5 + $0x278] sm:$0xff]
    %v161 = vld [vmem:[#allocation5 + $0x280] sm:$0xff]
    %v162 = vld [vmem:[#allocation5 + $0x288] sm:$0xff]
    %v163 = vld [vmem:[#allocation5 + $0x290] sm:$0xff]
    %v164 = vld [vmem:[#allocation5 + $0x298] sm:$0xff]
    %v165 = vld [vmem:[#allocation5 + $0x2a0] sm:$0xff]
    %v166 = vld [vmem:[#allocation5 + $0x2a8] sm:$0xff]
    %v167 = vld [vmem:[#allocation5 + $0x2b0] sm:$0xff]
    %v168 = vld [vmem:[#allocation5 + $0x2b8] sm:$0xff]
    %v169 = vld [vmem:[#allocation5 + $0x2c0] sm:$0xff]
    %v170 = vld [vmem:[#allocation5 + $0x2c8] sm:$0xff]
    %v171 = vld [vmem:[#allocation5 + $0x2d0] sm:$0xff]
    %v172 = vld [vmem:[#allocation5 + $0x2d8] sm:$0xff]
    %v173 = vld [vmem:[#allocation5 + $0x2e0] sm:$0xff]
    %v174 = vld [vmem:[#allocation5 + $0x2e8] sm:$0xff]
    %v175 = vld [vmem:[#allocation5 + $0x2f0] sm:$0xff]
    %v176 = vld [vmem:[#allocation5 + $0x2f8] sm:$0xff]
    %v177 = vld [vmem:[#allocation5 + $0x300] sm:$0xff]
    %v178 = vld [vmem:[#allocation5 + $0x308] sm:$0xff]
    %v179 = vld [vmem:[#allocation5 + $0x310] sm:$0xff]
    %v180 = vld [vmem:[#allocation5 + $0x318] sm:$0xff]
    %v181 = vld [vmem:[#allocation5 + $0x320] sm:$0xff]
    %v182 = vld [vmem:[#allocation5 + $0x328] sm:$0xff]
    %v183 = vld [vmem:[#allocation5 + $0x330] sm:$0xff]
    %v184 = vld [vmem:[#allocation5 + $0x338] sm:$0xff]
    %v185 = vld [vmem:[#allocation5 + $0x340] sm:$0xff]
    %v186 = vld [vmem:[#allocation5 + $0x348] sm:$0xff]
    %v187 = vld [vmem:[#allocation5 + $0x350] sm:$0xff]
    %v188 = vld [vmem:[#allocation5 + $0x358] sm:$0xff]
    %v189 = vld [vmem:[#allocation5 + $0x360] sm:$0xff]
    %v190 = vld [vmem:[#allocation5 + $0x368] sm:$0xff]
    %v191 = vld [vmem:[#allocation5 + $0x370] sm:$0xff]
    %v192 = vld [vmem:[#allocation5 + $0x378] sm:$0xff]
    %v193 = vld [vmem:[#allocation5 + $0x380] sm:$0xff]
    %v194 = vld [vmem:[#allocation5 + $0x388] sm:$0xff]
    %v195 = vld [vmem:[#allocation5 + $0x390] sm:$0xff]
    %v196 = vld [vmem:[#allocation5 + $0x398] sm:$0xff]
    %v197 = vld [vmem:[#allocation5 + $0x3a0] sm:$0xff]
    %v198 = vld [vmem:[#allocation5 + $0x3a8] sm:$0xff]
    %v199 = vld [vmem:[#allocation5 + $0x3b0] sm:$0xff]
    %v200 = vld [vmem:[#allocation5 + $0x3b8] sm:$0xff]
    %v201 = vld [vmem:[#allocation5 + $0x3c0] sm:$0xff]
    %v202 = vld [vmem:[#allocation5 + $0x3c8] sm:$0xff]
    %v203 = vld [vmem:[#allocation5 + $0x3d0] sm:$0xff]
    %v204 = vld [vmem:[#allocation5 + $0x3d8] sm:$0xff]
    %v205 = vld [vmem:[#allocation5 + $0x3e0] sm:$0xff]
    %v206 = vld [vmem:[#allocation5 + $0x3e8] sm:$0xff]
    %v207 = vld [vmem:[#allocation5 + $0x3f0] sm:$0xff]
    %v208 = vld [vmem:[#allocation5 + $0x3f8] sm:$0xff]
    %v209 = vld [vmem:[#allocation5 + $0x400] sm:$0xff]
    %v210 = vld [vmem:[#allocation5 + $0x408] sm:$0xff]
    %v211 = vld [vmem:[#allocation5 + $0x410] sm:$0xff]
    %v212 = vld [vmem:[#allocation5 + $0x418] sm:$0xff]
    %v213 = vld [vmem:[#allocation5 + $0x420] sm:$0xff]
    %v214 = vld [vmem:[#allocation5 + $0x428] sm:$0xff]
    %v215 = vld [vmem:[#allocation5 + $0x430] sm:$0xff]
    %v216 = vld [vmem:[#allocation5 + $0x438] sm:$0xff]
    %v217 = vld [vmem:[#allocation5 + $0x440] sm:$0xff]
    %v218 = vld [vmem:[#allocation5 + $0x448] sm:$0xff]
    %v219 = vld [vmem:[#allocation5 + $0x450] sm:$0xff]
    %v220 = vld [vmem:[#allocation5 + $0x458] sm:$0xff]
    %v221 = vld [vmem:[#allocation5 + $0x460] sm:$0xff]
    %v222 = vld [vmem:[#allocation5 + $0x468] sm:$0xff]
    %v223 = vld [vmem:[#allocation5 + $0x470] sm:$0xff]
    %v224 = vld [vmem:[#allocation5 + $0x478] sm:$0xff]
    %v225 = vld [vmem:[#allocation5 + $0x480] sm:$0xff]
    %v226 = vld [vmem:[#allocation5 + $0x488] sm:$0xff]
    %v227 = vld [vmem:[#allocation5 + $0x490] sm:$0xff]
    %v228 = vld [vmem:[#allocation5 + $0x498] sm:$0xff]
    %v229 = vld [vmem:[#allocation5 + $0x4a0] sm:$0xff]
    %v230 = vld [vmem:[#allocation5 + $0x4a8] sm:$0xff]
    %v231 = vld [vmem:[#allocation5 + $0x4b0] sm:$0xff]
    %v232 = vld [vmem:[#allocation5 + $0x4b8] sm:$0xff]
    %v233 = vld [vmem:[#allocation5 + $0x4c0] sm:$0xff]
    %v234 = vld [vmem:[#allocation5 + $0x4c8] sm:$0xff]
    %v235 = vld [vmem:[#allocation5 + $0x4d0] sm:$0xff]
    %v236 = vld [vmem:[#allocation5 + $0x4d8] sm:$0xff]
    %v237 = vld [vmem:[#allocation5 + $0x4e0] sm:$0xff]
    %v238 = vld [vmem:[#allocation5 + $0x4e8] sm:$0xff]
    %v239 = vld [vmem:[#allocation5 + $0x4f0] sm:$0xff]
    %v240 = vld [vmem:[#allocation5 + $0x4f8] sm:$0xff]
    %v241 = vld [vmem:[#allocation5 + $0x500] sm:$0xff]
    %v242 = vld [vmem:[#allocation5 + $0x508] sm:$0xff]
    %v243 = vld [vmem:[#allocation5 + $0x510] sm:$0xff]
    %v244 = vld [vmem:[#allocation5 + $0x518] sm:$0xff]
    %v245 = vld [vmem:[#allocation5 + $0x520] sm:$0xff]
    %v246 = vld [vmem:[#allocation5 + $0x528] sm:$0xff]
    %v247 = vld [vmem:[#allocation5 + $0x530] sm:$0xff]
    %v248 = vld [vmem:[#allocation5 + $0x538] sm:$0xff]
    %v249 = vld [vmem:[#allocation5 + $0x540] sm:$0xff]
    %v250 = vld [vmem:[#allocation5 + $0x548] sm:$0xff]
    %v251 = vld [vmem:[#allocation5 + $0x550] sm:$0xff]
    %v252 = vld [vmem:[#allocation5 + $0x558] sm:$0xff]
    %v253 = vld [vmem:[#allocation5 + $0x560] sm:$0xff]
    %v254 = vld [vmem:[#allocation5 + $0x568] sm:$0xff]
    %v255 = vld [vmem:[#allocation5 + $0x570] sm:$0xff]
    %v256 = vld [vmem:[#allocation5 + $0x578] sm:$0xff]
    %v257 = vld [vmem:[#allocation5 + $0x580] sm:$0xff]
    %v258 = vld [vmem:[#allocation5 + $0x588] sm:$0xff]
    %v259 = vld [vmem:[#allocation5 + $0x590] sm:$0xff]
    %v260 = vld [vmem:[#allocation5 + $0x598] sm:$0xff]
    %v261 = vld [vmem:[#allocation5 + $0x5a0] sm:$0xff]
    %v262 = vld [vmem:[#allocation5 + $0x5a8] sm:$0xff]
    %v263 = vld [vmem:[#allocation5 + $0x5b0] sm:$0xff]
    %v264 = vld [vmem:[#allocation5 + $0x5b8] sm:$0xff]
    %v265 = vld [vmem:[#allocation5 + $0x5c0] sm:$0xff]
    %v266 = vld [vmem:[#allocation5 + $0x5c8] sm:$0xff]
    %v267 = vld [vmem:[#allocation5 + $0x5d0] sm:$0xff]
    %v268 = vld [vmem:[#allocation5 + $0x5d8] sm:$0xff]
    %v269 = vld [vmem:[#allocation5 + $0x5e0] sm:$0xff]
    %v270 = vld [vmem:[#allocation5 + $0x5e8] sm:$0xff]
    %v271 = vld [vmem:[#allocation5 + $0x5f0] sm:$0xff]
    %v272 = vld [vmem:[#allocation5 + $0x5f8] sm:$0xff]
    %v273 = vld [vmem:[#allocation5 + $0x600] sm:$0xff]
    %v274 = vld [vmem:[#allocation5 + $0x608] sm:$0xff]
    %v275 = vld [vmem:[#allocation5 + $0x610] sm:$0xff]
    %v276 = vld [vmem:[#allocation5 + $0x618] sm:$0xff]
    %v277 = vld [vmem:[#allocation5 + $0x620] sm:$0xff]
    %v278 = vld [vmem:[#allocation5 + $0x628] sm:$0xff]
    %v279 = vld [vmem:[#allocation5 + $0x630] sm:$0xff]
    %v280 = vld [vmem:[#allocation5 + $0x638] sm:$0xff]
    %v281 = vld [vmem:[#allocation5 + $0x640] sm:$0xff]
    %v282 = vld [vmem:[#allocation5 + $0x648] sm:$0xff]
    %v283 = vld [vmem:[#allocation5 + $0x650] sm:$0xff]
    %v284 = vld [vmem:[#allocation5 + $0x658] sm:$0xff]
    %v285 = vld [vmem:[#allocation5 + $0x660] sm:$0xff]
    %v286 = vld [vmem:[#allocation5 + $0x668] sm:$0xff]
    %v287 = vld [vmem:[#allocation5 + $0x670] sm:$0xff]
    %v288 = vld [vmem:[#allocation5 + $0x678] sm:$0xff]
    %v289 = vld [vmem:[#allocation5 + $0x680] sm:$0xff]
    %v290 = vld [vmem:[#allocation5 + $0x688] sm:$0xff]
    %v291 = vld [vmem:[#allocation5 + $0x690] sm:$0xff]
    %v292 = vld [vmem:[#allocation5 + $0x698] sm:$0xff]
    %v293 = vld [vmem:[#allocation5 + $0x6a0] sm:$0xff]
    %v294 = vld [vmem:[#allocation5 + $0x6a8] sm:$0xff]
    %v295 = vld [vmem:[#allocation5 + $0x6b0] sm:$0xff]
    %v296 = vld [vmem:[#allocation5 + $0x6b8] sm:$0xff]
    %v297 = vld [vmem:[#allocation5 + $0x6c0] sm:$0xff]
    %v298 = vld [vmem:[#allocation5 + $0x6c8] sm:$0xff]
    %v299 = vld [vmem:[#allocation5 + $0x6d0] sm:$0xff]
    %v300 = vld [vmem:[#allocation5 + $0x6d8] sm:$0xff]
    %v301 = vld [vmem:[#allocation5 + $0x6e0] sm:$0xff]
    %v302 = vld [vmem:[#allocation5 + $0x6e8] sm:$0xff]
    %v303 = vld [vmem:[#allocation5 + $0x6f0] sm:$0xff]
    %v304 = vld [vmem:[#allocation5 + $0x6f8] sm:$0xff]
    %v305 = vld [vmem:[#allocation5 + $0x700] sm:$0xff]
    %v306 = vld [vmem:[#allocation5 + $0x708] sm:$0xff]
    %v307 = vld [vmem:[#allocation5 + $0x710] sm:$0xff]
    %v308 = vld [vmem:[#allocation5 + $0x718] sm:$0xff]
    %v309 = vld [vmem:[#allocation5 + $0x720] sm:$0xff]
    %v310 = vld [vmem:[#allocation5 + $0x728] sm:$0xff]
    %v311 = vld [vmem:[#allocation5 + $0x730] sm:$0xff]
    %v312 = vld [vmem:[#allocation5 + $0x738] sm:$0xff]
    %v313 = vld [vmem:[#allocation5 + $0x740] sm:$0xff]
    %v314 = vld [vmem:[#allocation5 + $0x748] sm:$0xff]
    %v315 = vld [vmem:[#allocation5 + $0x750] sm:$0xff]
    %v316 = vld [vmem:[#allocation5 + $0x758] sm:$0xff]
    %v317 = vld [vmem:[#allocation5 + $0x760] sm:$0xff]
    %v318 = vld [vmem:[#allocation5 + $0x768] sm:$0xff]
    %v319 = vld [vmem:[#allocation5 + $0x770] sm:$0xff]
    %v320 = vld [vmem:[#allocation5 + $0x778] sm:$0xff]
    %v321 = vld [vmem:[#allocation5 + $0x780] sm:$0xff]
    %v322 = vld [vmem:[#allocation5 + $0x788] sm:$0xff]
    %v323 = vld [vmem:[#allocation5 + $0x790] sm:$0xff]
    %v324 = vld [vmem:[#allocation5 + $0x798] sm:$0xff]
    %v325 = vld [vmem:[#allocation5 + $0x7a0] sm:$0xff]
    %v326 = vld [vmem:[#allocation5 + $0x7a8] sm:$0xff]
    %v327 = vld [vmem:[#allocation5 + $0x7b0] sm:$0xff]
    %v328 = vld [vmem:[#allocation5 + $0x7b8] sm:$0xff]
    %v329 = vld [vmem:[#allocation5 + $0x7c0] sm:$0xff]
    %v330 = vld [vmem:[#allocation5 + $0x7c8] sm:$0xff]
    %v331 = vld [vmem:[#allocation5 + $0x7d0] sm:$0xff]
    %v332 = vld [vmem:[#allocation5 + $0x7d8] sm:$0xff]
    %v333 = vld [vmem:[#allocation5 + $0x7e0] sm:$0xff]
    %v334 = vld [vmem:[#allocation5 + $0x7e8] sm:$0xff]
    %v335 = vld [vmem:[#allocation5 + $0x7f0] sm:$0xff]
    %v336 = vld [vmem:[#allocation5 + $0x7f8] sm:$0xff]
    %337 = vmatprep.subr.mxu0 %v82
    %338 = vmatpush1.msra.mxu0 %v81
    %339 = vmatprep.subr.mxu0 %v86
    %340 = vmatpush1.msra.mxu0 %v85
    %341 = vmatprep.subr.mxu0 %v90
    %342 = vmatpush1.msra.mxu0 %v89
    %343 = vmatprep.subr.mxu0 %v94
    %344 = vmatpush1.msra.mxu0 %v93
    %345 = vmatprep.subr.mxu0 %v98
    %346 = vmatpush1.msra.mxu0 %v97
    %347 = vmatprep.subr.mxu0 %v102
    %348 = vmatpush1.msra.mxu0 %v101
    %349 = vmatprep.subr.mxu0 %v106
    %350 = vmatpush1.msra.mxu0 %v105
    %351 = vmatprep.subr.mxu0 %v110
    %352 = vmatpush1.msra.mxu0 %v109
    %353 = vmatprep.subr.mxu0 %v114
    %354 = vmatpush1.msra.mxu0 %v113
    %355 = vmatprep.subr.mxu0 %v118
    %356 = vmatpush1.msra.mxu0 %v117
    %357 = vmatprep.subr.mxu0 %v122
    %358 = vmatpush1.msra.mxu0 %v121
    %359 = vmatprep.subr.mxu0 %v126
    %360 = vmatpush1.msra.mxu0 %v125
    %361 = vmatprep.subr.mxu0 %v130
    %362 = vmatpush1.msra.mxu0 %v129
    %363 = vmatprep.subr.mxu0 %v134
    %364 = vmatpush1.msra.mxu0 %v133
    %365 = vmatprep.subr.mxu0 %v138
    %366 = vmatpush1.msra.mxu0 %v137
    %367 = vmatprep.subr.mxu0 %v142
    %368 = vmatpush1.msra.mxu0 %v141
    %369 = vmatprep.subr.mxu0 %v146
    %370 = vmatpush1.msra.mxu0 %v145
    %371 = vmatprep.subr.mxu0 %v150
    %372 = vmatpush1.msra.mxu0 %v149
    %373 = vmatprep.subr.mxu0 %v154
    %374 = vmatpush1.msra.mxu0 %v153
    %375 = vmatprep.subr.mxu0 %v158
    %376 = vmatpush1.msra.mxu0 %v157
    %377 = vmatprep.subr.mxu0 %v162
    %378 = vmatpush1.msra.mxu0 %v161
    %379 = vmatprep.subr.mxu0 %v166
    %380 = vmatpush1.msra.mxu0 %v165
    %381 = vmatprep.subr.mxu0 %v170
    %382 = vmatpush1.msra.mxu0 %v169
    %383 = vmatprep.subr.mxu0 %v174
    %384 = vmatpush1.msra.mxu0 %v173
    %385 = vmatprep.subr.mxu0 %v178
    %386 = vmatpush1.msra.mxu0 %v177
    %387 = vmatprep.subr.mxu0 %v182
    %388 = vmatpush1.msra.mxu0 %v181
    %389 = vmatprep.subr.mxu0 %v186
    %390 = vmatpush1.msra.mxu0 %v185
    %391 = vmatprep.subr.mxu0 %v190
    %392 = vmatpush1.msra.mxu0 %v189
    %393 = vmatprep.subr.mxu0 %v194
    %394 = vmatpush1.msra.mxu0 %v193
    %395 = vmatprep.subr.mxu0 %v198
    %396 = vmatpush1.msra.mxu0 %v197
    %397 = vmatprep.subr.mxu0 %v202
    %398 = vmatpush1.msra.mxu0 %v201
    %399 = vmatprep.subr.mxu0 %v206
    %400 = vmatpush1.msra.mxu0 %v205
    %401 = vmatprep.mubr.f32.mxu0 %v74
    %402 = vmatmul.mubr.f32.gmra.mrb[0].mxu0 %v73
    %v403 = vpop.f32.mrb[0].mxu0
    %v404 = vadd.f32 0.0, %v403
    %v405 = vpop.f32.mrb[0].mxu0
    %v406 = vadd.f32 0.0, %v405
    %407 = vmatprep.mubr.f32.mxu0 %v78
    %408 = vmatmul.mubr.f32.gmra.mrb[0].mxu0 %v77
    %v409 = vpop.f32.mrb[0].mxu0
    %v410 = vadd.f32 0.0, %v409
    %v411 = vpop.f32.mrb[0].mxu0
    %v412 = vadd.f32 0.0, %v411
    %413 = vdwg.mxu0
    %414 = vmatprep.subr.mxu0 %v210
    %415 = vmatpush1.msra.mxu0 %v209
    %416 = vmatprep.subr.mxu0 %v214
    %417 = vmatpush1.msra.mxu0 %v213
    %418 = vmatprep.subr.mxu0 %v218
    %419 = vmatpush1.msra.mxu0 %v217
    %420 = vmatprep.subr.mxu0 %v222
    %421 = vmatpush1.msra.mxu0 %v221
    %422 = vmatprep.subr.mxu0 %v226
    %423 = vmatpush1.msra.mxu0 %v225
    %424 = vmatprep.subr.mxu0 %v230
    %425 = vmatpush1.msra.mxu0 %v229
    %426 = vmatprep.subr.mxu0 %v234
    %427 = vmatpush1.msra.mxu0 %v233
    %428 = vmatprep.subr.mxu0 %v238
    %429 = vmatpush1.msra.mxu0 %v237
    %430 = vmatprep.subr.mxu0 %v242
    %431 = vmatpush1.msra.mxu0 %v241
    %432 = vmatprep.subr.mxu0 %v246
    %433 = vmatpush1.msra.mxu0 %v245
    %434 = vmatprep.subr.mxu0 %v250
    %435 = vmatpush1.msra.mxu0 %v249
    %436 = vmatprep.subr.mxu0 %v254
    %437 = vmatpush1.msra.mxu0 %v253
    %438 = vmatprep.subr.mxu0 %v258
    %439 = vmatpush1.msra.mxu0 %v257
    %440 = vmatprep.subr.mxu0 %v262
    %441 = vmatpush1.msra.mxu0 %v261
    %442 = vmatprep.subr.mxu0 %v266
    %443 = vmatpush1.msra.mxu0 %v265
    %444 = vmatprep.subr.mxu0 %v270
    %445 = vmatpush1.msra.mxu0 %v269
    %446 = vmatprep.subr.mxu0 %v274
    %447 = vmatpush1.msra.mxu0 %v273
    %448 = vmatprep.subr.mxu0 %v278
    %449 = vmatpush1.msra.mxu0 %v277
    %450 = vmatprep.subr.mxu0 %v282
    %451 = vmatpush1.msra.mxu0 %v281
    %452 = vmatprep.subr.mxu0 %v286
    %453 = vmatpush1.msra.mxu0 %v285
    %454 = vmatprep.subr.mxu0 %v290
    %455 = vmatpush1.msra.mxu0 %v289
    %456 = vmatprep.subr.mxu0 %v294
    %457 = vmatpush1.msra.mxu0 %v293
    %458 = vmatprep.subr.mxu0 %v298
    %459 = vmatpush1.msra.mxu0 %v297
    %460 = vmatprep.subr.mxu0 %v302
    %461 = vmatpush1.msra.mxu0 %v301
    %462 = vmatprep.subr.mxu0 %v306
    %463 = vmatpush1.msra.mxu0 %v305
    %464 = vmatprep.subr.mxu0 %v310
    %465 = vmatpush1.msra.mxu0 %v309
    %466 = vmatprep.subr.mxu0 %v314
    %467 = vmatpush1.msra.mxu0 %v313
    %468 = vmatprep.subr.mxu0 %v318
    %469 = vmatpush1.msra.mxu0 %v317
    %470 = vmatprep.subr.mxu0 %v322
    %471 = vmatpush1.msra.mxu0 %v321
    %472 = vmatprep.subr.mxu0 %v326
    %473 = vmatpush1.msra.mxu0 %v325
    %474 = vmatprep.subr.mxu0 %v330
    %475 = vmatpush1.msra.mxu0 %v329
    %476 = vmatprep.subr.mxu0 %v334
    %477 = vmatpush1.msra.mxu0 %v333
    %478 = vmatprep.mubr.f32.mxu0 %v76
    %479 = vmatmul.mubr.f32.gmra.mrb[0].mxu0 %v75
    %v480 = vpop.f32.mrb[0].mxu0
    %v481 = vadd.f32 %v404, %v480
    %v482 = vpop.f32.mrb[0].mxu0
    %v483 = vadd.f32 %v406, %v482
    %484 = vmatprep.mubr.f32.mxu0 %v80
    %485 = vmatmul.mubr.f32.gmra.mrb[0].mxu0 %v79
    %v486 = vpop.f32.mrb[0].mxu0
    %v487 = vadd.f32 %v410, %v486
    %v488 = vpop.f32.mrb[0].mxu0
    %v489 = vadd.f32 %v412, %v488
    %490 = vdwg.mxu0
    %491 = vmatprep.subr.mxu0 %v84
    %492 = vmatpush1.msra.mxu0 %v83
    %493 = vmatprep.subr.mxu0 %v88
    %494 = vmatpush1.msra.mxu0 %v87
    %495 = vmatprep.subr.mxu0 %v92
    %496 = vmatpush1.msra.mxu0 %v91
    %497 = vmatprep.subr.mxu0 %v96
    %498 = vmatpush1.msra.mxu0 %v95
    %499 = vmatprep.subr.mxu0 %v100
    %500 = vmatpush1.msra.mxu0 %v99
    %501 = vmatprep.subr.mxu0 %v104
    %502 = vmatpush1.msra.mxu0 %v103
    %503 = vmatprep.subr.mxu0 %v108
    %504 = vmatpush1.msra.mxu0 %v107
    %505 = vmatprep.subr.mxu0 %v112
    %506 = vmatpush1.msra.mxu0 %v111
    %507 = vmatprep.subr.mxu0 %v116
    %508 = vmatpush1.msra.mxu0 %v115
    %509 = vmatprep.subr.mxu0 %v120
    %510 = vmatpush1.msra.mxu0 %v119
    %511 = vmatprep.subr.mxu0 %v124
    %512 = vmatpush1.msra.mxu0 %v123
    %513 = vmatprep.subr.mxu0 %v128
    %514 = vmatpush1.msra.mxu0 %v127
    %515 = vmatprep.subr.mxu0 %v132
    %516 = vmatpush1.msra.mxu0 %v131
    %517 = vmatprep.subr.mxu0 %v136
    %518 = vmatpush1.msra.mxu0 %v135
    %519 = vmatprep.subr.mxu0 %v140
    %520 = vmatpush1.msra.mxu0 %v139
    %521 = vmatprep.subr.mxu0 %v144
    %522 = vmatpush1.msra.mxu0 %v143
    %523 = vmatprep.subr.mxu0 %v148
    %524 = vmatpush1.msra.mxu0 %v147
    %525 = vmatprep.subr.mxu0 %v152
    %526 = vmatpush1.msra.mxu0 %v151
    %527 = vmatprep.subr.mxu0 %v156
    %528 = vmatpush1.msra.mxu0 %v155
    %529 = vmatprep.subr.mxu0 %v160
    %530 = vmatpush1.msra.mxu0 %v159
    %531 = vmatprep.subr.mxu0 %v164
    %532 = vmatpush1.msra.mxu0 %v163
    %533 = vmatprep.subr.mxu0 %v168
    %534 = vmatpush1.msra.mxu0 %v167
    %535 = vmatprep.subr.mxu0 %v172
    %536 = vmatpush1.msra.mxu0 %v171
    %537 = vmatprep.subr.mxu0 %v176
    %538 = vmatpush1.msra.mxu0 %v175
    %539 = vmatprep.subr.mxu0 %v180
    %540 = vmatpush1.msra.mxu0 %v179
    %541 = vmatprep.subr.mxu0 %v184
    %542 = vmatpush1.msra.mxu0 %v183
    %543 = vmatprep.subr.mxu0 %v188
    %544 = vmatpush1.msra.mxu0 %v187
    %545 = vmatprep.subr.mxu0 %v192
    %546 = vmatpush1.msra.mxu0 %v191
    %547 = vmatprep.subr.mxu0 %v196
    %548 = vmatpush1.msra.mxu0 %v195
    %549 = vmatprep.subr.mxu0 %v200
    %550 = vmatpush1.msra.mxu0 %v199
    %551 = vmatprep.subr.mxu0 %v204
    %552 = vmatpush1.msra.mxu0 %v203
    %553 = vmatprep.subr.mxu0 %v208
    %554 = vmatpush1.msra.mxu0 %v207
    %555 = vmatprep.mubr.f32.mxu0 %v74
    %556 = vmatmul.mubr.f32.gmra.mrb[0].mxu0 %v73
    %v557 = vpop.f32.mrb[0].mxu0
    %v558 = vadd.f32 0.0, %v557
    %v559 = vpop.f32.mrb[0].mxu0
    %v560 = vadd.f32 0.0, %v559
    %561 = vmatprep.mubr.f32.mxu0 %v78
    %562 = vmatmul.mubr.f32.gmra.mrb[0].mxu0 %v77
    %v563 = vpop.f32.mrb[0].mxu0
    %v564 = vadd.f32 0.0, %v563
    %v565 = vpop.f32.mrb[0].mxu0
    %v566 = vadd.f32 0.0, %v565
    %567 = vdwg.mxu0
    %568 = vmatprep.subr.mxu0 %v212
    %569 = vmatpush1.msra.mxu0 %v211
    %570 = vmatprep.subr.mxu0 %v216
    %571 = vmatpush1.msra.mxu0 %v215
    %572 = vmatprep.subr.mxu0 %v220
    %573 = vmatpush1.msra.mxu0 %v219
    %574 = vmatprep.subr.mxu0 %v224
    %575 = vmatpush1.msra.mxu0 %v223
    %576 = vmatprep.subr.mxu0 %v228
    %577 = vmatpush1.msra.mxu0 %v227
    %578 = vmatprep.subr.mxu0 %v232
    %579 = vmatpush1.msra.mxu0 %v231
    %580 = vmatprep.subr.mxu0 %v236
    %581 = vmatpush1.msra.mxu0 %v235
    %582 = vmatprep.subr.mxu0 %v240
    %583 = vmatpush1.msra.mxu0 %v239
    %584 = vmatprep.subr.mxu0 %v244
    %585 = vmatpush1.msra.mxu0 %v243
    %586 = vmatprep.subr.mxu0 %v248
    %587 = vmatpush1.msra.mxu0 %v247
    %588 = vmatprep.subr.mxu0 %v252
    %589 = vmatpush1.msra.mxu0 %v251
    %590 = vmatprep.subr.mxu0 %v256
    %591 = vmatpush1.msra.mxu0 %v255
    %592 = vmatprep.subr.mxu0 %v260
    %593 = vmatpush1.msra.mxu0 %v259
    %594 = vmatprep.subr.mxu0 %v264
    %595 = vmatpush1.msra.mxu0 %v263
    %596 = vmatprep.subr.mxu0 %v268
    %597 = vmatpush1.msra.mxu0 %v267
    %598 = vmatprep.subr.mxu0 %v272
    %599 = vmatpush1.msra.mxu0 %v271
    %600 = vmatprep.subr.mxu0 %v276
    %601 = vmatpush1.msra.mxu0 %v275
    %602 = vmatprep.subr.mxu0 %v280
    %603 = vmatpush1.msra.mxu0 %v279
    %604 = vmatprep.subr.mxu0 %v284
    %605 = vmatpush1.msra.mxu0 %v283
    %606 = vmatprep.subr.mxu0 %v288
    %607 = vmatpush1.msra.mxu0 %v287
    %608 = vmatprep.subr.mxu0 %v292
    %609 = vmatpush1.msra.mxu0 %v291
    %610 = vmatprep.subr.mxu0 %v296
    %611 = vmatpush1.msra.mxu0 %v295
    %612 = vmatprep.subr.mxu0 %v300
    %613 = vmatpush1.msra.mxu0 %v299
    %614 = vmatprep.subr.mxu0 %v304
    %615 = vmatpush1.msra.mxu0 %v303
    %616 = vmatprep.subr.mxu0 %v308
    %617 = vmatpush1.msra.mxu0 %v307
    %618 = vmatprep.subr.mxu0 %v312
    %619 = vmatpush1.msra.mxu0 %v311
    %620 = vmatprep.subr.mxu0 %v316
    %621 = vmatpush1.msra.mxu0 %v315
    %622 = vmatprep.subr.mxu0 %v320
    %623 = vmatpush1.msra.mxu0 %v319
    %624 = vmatprep.subr.mxu0 %v324
    %625 = vmatpush1.msra.mxu0 %v323
    %626 = vmatprep.subr.mxu0 %v328
    %627 = vmatpush1.msra.mxu0 %v327
    %628 = vmatprep.subr.mxu0 %v332
    %629 = vmatpush1.msra.mxu0 %v331
    %630 = vmatprep.subr.mxu0 %v336
    %631 = vmatpush1.msra.mxu0 %v335
    %632 = vmatprep.mubr.f32.mxu0 %v76
    %633 = vmatmul.mubr.f32.gmra.mrb[0].mxu0 %v75
    %v634 = vpop.f32.mrb[0].mxu0
    %v635 = vadd.f32 %v558, %v634
    %v636 = vpop.f32.mrb[0].mxu0
    %v637 = vadd.f32 %v560, %v636
    %638 = vmatprep.mubr.f32.mxu0 %v80
    %639 = vmatmul.mubr.f32.gmra.mrb[0].mxu0 %v79
    %v640 = vpop.f32.mrb[0].mxu0
    %v641 = vadd.f32 %v564, %v640
    %v642 = vpop.f32.mrb[0].mxu0
    %v643 = vadd.f32 %v566, %v642
    %644 = vdwg.mxu0
    %v645 = vmul.f32 %v481, %v481
    %v646 = vmul.f32 %v483, %v483
    %v647 = vmul.f32 %v487, %v487
    %v648 = vmul.f32 %v489, %v489
    %v649 = vmul.f32 %v635, %v635
    %v650 = vmul.f32 %v637, %v637
    %v651 = vmul.f32 %v641, %v641
    %v652 = vmul.f32 %v643, %v643
    %v653 = vadd.f32 %v645, %v649
    %v654 = vadd.f32 %v646, %v650
    %v655 = vadd.f32 %v647, %v651
    %v656 = vadd.f32 %v648, %v652
    %v657 = vld [vmem:[#allocation7] sm:$0xff]
    %v658 = vld [vmem:[#allocation7 + $0x8] sm:$0xff]
    %v659 = vld [vmem:[#allocation7 + $0x10] sm:$0xff]
    %v660 = vld [vmem:[#allocation7 + $0x18] sm:$0xff]
    %v661 = vld [vmem:[#allocation7 + $0x20] sm:$0xff]
    %v662 = vld [vmem:[#allocation7 + $0x28] sm:$0xff]
    %v663 = vld [vmem:[#allocation7 + $0x30] sm:$0xff]
    %v664 = vld [vmem:[#allocation7 + $0x38] sm:$0xff]
    %v665 = vld [vmem:[#allocation7 + $0x40] sm:$0xff]
    %v666 = vld [vmem:[#allocation7 + $0x48] sm:$0xff]
    %v667 = vld [vmem:[#allocation7 + $0x50] sm:$0xff]
    %v668 = vld [vmem:[#allocation7 + $0x58] sm:$0xff]
    %v669 = vld [vmem:[#allocation7 + $0x60] sm:$0xff]
    %v670 = vld [vmem:[#allocation7 + $0x68] sm:$0xff]
    %v671 = vld [vmem:[#allocation7 + $0x70] sm:$0xff]
    %v672 = vld [vmem:[#allocation7 + $0x78] sm:$0xff]
    %v673 = vld [vmem:[#allocation7 + $0x80] sm:$0xff]
    %v674 = vld [vmem:[#allocation7 + $0x88] sm:$0xff]
    %v675 = vld [vmem:[#allocation7 + $0x90] sm:$0xff]
    %v676 = vld [vmem:[#allocation7 + $0x98] sm:$0xff]
    %v677 = vld [vmem:[#allocation7 + $0xa0] sm:$0xff]
    %v678 = vld [vmem:[#allocation7 + $0xa8] sm:$0xff]
    %v679 = vld [vmem:[#allocation7 + $0xb0] sm:$0xff]
    %v680 = vld [vmem:[#allocation7 + $0xb8] sm:$0xff]
    %v681 = vld [vmem:[#allocation7 + $0xc0] sm:$0xff]
    %v682 = vld [vmem:[#allocation7 + $0xc8] sm:$0xff]
    %v683 = vld [vmem:[#allocation7 + $0xd0] sm:$0xff]
    %v684 = vld [vmem:[#allocation7 + $0xd8] sm:$0xff]
    %v685 = vld [vmem:[#allocation7 + $0xe0] sm:$0xff]
    %v686 = vld [vmem:[#allocation7 + $0xe8] sm:$0xff]
    %v687 = vld [vmem:[#allocation7 + $0xf0] sm:$0xff]
    %v688 = vld [vmem:[#allocation7 + $0xf8] sm:$0xff]
    %689 = vmatprep.subr.mxu0 0.0
    %690 = vmatpush1.msra.mxu0 %v657
    %691 = vmatprep.subr.mxu0 0.0
    %692 = vmatpush1.msra.mxu0 %v658
    %693 = vmatprep.subr.mxu0 0.0
    %694 = vmatpush1.msra.mxu0 %v659
    %695 = vmatprep.subr.mxu0 0.0
    %696 = vmatpush1.msra.mxu0 %v660
    %697 = vmatprep.subr.mxu0 0.0
    %698 = vmatpush1.msra.mxu0 %v661
    %699 = vmatprep.subr.mxu0 0.0
    %700 = vmatpush1.msra.mxu0 %v662
    %701 = vmatprep.subr.mxu0 0.0
    %702 = vmatpush1.msra.mxu0 %v663
    %703 = vmatprep.subr.mxu0 0.0
    %704 = vmatpush1.msra.mxu0 %v664
    %705 = vmatprep.subr.mxu0 0.0
    %706 = vmatpush1.msra.mxu0 %v665
    %707 = vmatprep.subr.mxu0 0.0
    %708 = vmatpush1.msra.mxu0 %v666
    %709 = vmatprep.subr.mxu0 0.0
    %710 = vmatpush1.msra.mxu0 %v667
    %711 = vmatprep.subr.mxu0 0.0
    %712 = vmatpush1.msra.mxu0 %v668
    %713 = vmatprep.subr.mxu0 0.0
    %714 = vmatpush1.msra.mxu0 %v669
    %715 = vmatprep.subr.mxu0 0.0
    %716 = vmatpush1.msra.mxu0 %v670
    %717 = vmatprep.subr.mxu0 0.0
    %718 = vmatpush1.msra.mxu0 %v671
    %719 = vmatprep.subr.mxu0 0.0
    %720 = vmatpush1.msra.mxu0 %v672
    %721 = vmatprep.subr.mxu0 0.0
    %722 = vmatpush1.msra.mxu0 %v673
    %723 = vmatprep.subr.mxu0 0.0
    %724 = vmatpush1.msra.mxu0 %v674
    %725 = vmatprep.subr.mxu0 0.0
    %726 = vmatpush1.msra.mxu0 %v675
    %727 = vmatprep.subr.mxu0 0.0
    %728 = vmatpush1.msra.mxu0 %v676
    %729 = vmatprep.subr.mxu0 0.0
    %730 = vmatpush1.msra.mxu0 %v677
    %731 = vmatprep.subr.mxu0 0.0
    %732 = vmatpush1.msra.mxu0 %v678
    %733 = vmatprep.subr.mxu0 0.0
    %734 = vmatpush1.msra.mxu0 %v679
    %735 = vmatprep.subr.mxu0 0.0
    %736 = vmatpush1.msra.mxu0 %v680
    %737 = vmatprep.subr.mxu0 0.0
    %738 = vmatpush1.msra.mxu0 %v681
    %739 = vmatprep.subr.mxu0 0.0
    %740 = vmatpush1.msra.mxu0 %v682
    %741 = vmatprep.subr.mxu0 0.0
    %742 = vmatpush1.msra.mxu0 %v683
    %743 = vmatprep.subr.mxu0 0.0
    %744 = vmatpush1.msra.mxu0 %v684
    %745 = vmatprep.subr.mxu0 0.0
    %746 = vmatpush1.msra.mxu0 %v685
    %747 = vmatprep.subr.mxu0 0.0
    %748 = vmatpush1.msra.mxu0 %v686
    %749 = vmatprep.subr.mxu0 0.0
    %750 = vmatpush1.msra.mxu0 %v687
    %751 = vmatprep.subr.mxu0 0.0
    %752 = vmatpush1.msra.mxu0 %v688
    %753 = vmatprep.mubr.f32.mxu0 %v654
    %754 = vmatmul.mubr.f32.gmra.mrb[0].mxu0 %v653
    %v755 = vpop.f32.mrb[0].mxu0
    %v756 = vadd.f32 1e-06, %v755
    %v757 = vpop.f32.mrb[0].mxu0
    %758 = vmatprep.mubr.f32.mxu0 %v656
    %759 = vmatmul.mubr.f32.gmra.mrb[0].mxu0 %v655
    %v760 = vpop.f32.mrb[0].mxu0
    %v761 = vadd.f32 1e-06, %v760
    %v762 = vpop.f32.mrb[0].mxu0
    %763 = vdwg.mxu0
    %v764 = vlog2.pop %v756
    %v765 = vmul.f32 %v764, 0.6931472
    %v766 = vlog2.pop %v761
    %v767 = vmul.f32 %v766, 0.6931472
    %v768 = vld [vmem:[#allocation8] sm:$0xff]
    %v769 = vld [vmem:[#allocation8 + $0x8] sm:$0xff]
    %v770 = vld [vmem:[#allocation8 + $0x10] sm:$0xff]
    %v771 = vld [vmem:[#allocation8 + $0x18] sm:$0xff]
    %v772 = vld [vmem:[#allocation8 + $0x20] sm:$0xff]
    %v773 = vld [vmem:[#allocation8 + $0x28] sm:$0xff]
    %v774 = vld [vmem:[#allocation8 + $0x30] sm:$0xff]
    %v775 = vld [vmem:[#allocation8 + $0x38] sm:$0xff]
    %v776 = vld [vmem:[#allocation8 + $0x40] sm:$0xff]
    %v777 = vld [vmem:[#allocation8 + $0x48] sm:$0xff]
    %v778 = vld [vmem:[#allocation8 + $0x50] sm:$0xff]
    %v779 = vld [vmem:[#allocation8 + $0x58] sm:$0xff]
    %v780 = vld [vmem:[#allocation8 + $0x60] sm:$0xff]
    %v781 = vld [vmem:[#allocation8 + $0x68] sm:$0xff]
    %v782 = vld [vmem:[#allocation8 + $0x70] sm:$0xff]
    %v783 = vld [vmem:[#allocation8 + $0x78] sm:$0xff]
    %784 = vmatprep.subr.mxu0 0.0
    %785 = vmatpush1.msra.mxu0 %v768
    %786 = vmatprep.subr.mxu0 0.0
    %787 = vmatpush1.msra.mxu0 %v769
    %788 = vmatprep.subr.mxu0 0.0
    %789 = vmatpush1.msra.mxu0 %v770
    %790 = vmatprep.subr.mxu0 0.0
    %791 = vmatpush1.msra.mxu0 %v771
    %792 = vmatprep.subr.mxu0 0.0
    %793 = vmatpush1.msra.mxu0 %v772
    %794 = vmatprep.subr.mxu0 0.0
    %795 = vmatpush1.msra.mxu0 %v773
    %796 = vmatprep.subr.mxu0 0.0
    %797 = vmatpush1.msra.mxu0 %v774
    %798 = vmatprep.subr.mxu0 0.0
    %799 = vmatpush1.msra.mxu0 %v775
    %800 = vmatprep.subr.mxu0 0.0
    %801 = vmatpush1.msra.mxu0 %v776
    %802 = vmatprep.subr.mxu0 0.0
    %803 = vmatpush1.msra.mxu0 %v777
    %804 = vmatprep.subr.mxu0 0.0
    %805 = vmatpush1.msra.mxu0 %v778
    %806 = vmatprep.subr.mxu0 0.0
    %807 = vmatpush1.msra.mxu0 %v779
    %808 = vmatprep.subr.mxu0 0.0
    %809 = vmatpush1.msra.mxu0 %v780
    %810 = vmatprep.subr.mxu0 0.0
    %811 = vmatpush1.msra.mxu0 %v781
    %812 = vmatprep.subr.mxu0 0.0
    %813 = vmatpush1.msra.mxu0 %v782
    %814 = vmatprep.subr.mxu0 0.0
    %815 = vmatpush1.msra.mxu0 %v783
    %816 = vmatprep.subr.mxu0 0.0
    %817 = vmatpush1.msra.mxu0 0.0
    %818 = vmatprep.subr.mxu0 0.0
    %819 = vmatpush1.msra.mxu0 0.0
    %820 = vmatprep.subr.mxu0 0.0
    %821 = vmatpush1.msra.mxu0 0.0
    %822 = vmatprep.subr.mxu0 0.0
    %823 = vmatpush1.msra.mxu0 0.0
    %824 = vmatprep.subr.mxu0 0.0
    %825 = vmatpush1.msra.mxu0 0.0
    %826 = vmatprep.subr.mxu0 0.0
    %827 = vmatpush1.msra.mxu0 0.0
    %828 = vmatprep.subr.mxu0 0.0
    %829 = vmatpush1.msra.mxu0 0.0
    %830 = vmatprep.subr.mxu0 0.0
    %831 = vmatpush1.msra.mxu0 0.0
    %832 = vmatprep.subr.mxu0 0.0
    %833 = vmatpush1.msra.mxu0 0.0
    %834 = vmatprep.subr.mxu0 0.0
    %835 = vmatpush1.msra.mxu0 0.0
    %836 = vmatprep.subr.mxu0 0.0
    %837 = vmatpush1.msra.mxu0 0.0
    %838 = vmatprep.subr.mxu0 0.0
    %839 = vmatpush1.msra.mxu0 0.0
    %840 = vmatprep.subr.mxu0 0.0
    %841 = vmatpush1.msra.mxu0 0.0
    %842 = vmatprep.subr.mxu0 0.0
    %843 = vmatpush1.msra.mxu0 0.0
    %844 = vmatprep.subr.mxu0 0.0
    %845 = vmatpush1.msra.mxu0 0.0
    %846 = vmatprep.subr.mxu0 0.0
    %847 = vmatpush1.msra.mxu0 0.0
    %848 = vmatprep.mubr.f32.mxu0 0.0
    %849 = vmatmul.mubr.f32.gmra.mrb[0].mxu0 %v765
    %v850 = vpop.f32.mrb[0].mxu0
    %v851 = vadd.f32 0.0, %v850
    %v852 = vpop.f32.mrb[0].mxu0
    %853 = vmatprep.mubr.f32.mxu0 0.0
    %854 = vmatmul.mubr.f32.gmra.mrb[0].mxu0 %v767
    %v855 = vpop.f32.mrb[0].mxu0
    %v856 = vadd.f32 0.0, %v855
    %v857 = vpop.f32.mrb[0].mxu0
    %858 = vdwg.mxu0
    %859 = vst [vmem:[#allocation10] sm:$0xff] %v851
    %860 = vst [vmem:[#allocation10 + $0x8] sm:$0xff] %v856
    // Predicated region
    $region34: #{tpu_custom_call.1} parent=1 // pred_check
      _
    $region35: #{tpu_custom_call.1} parent=1 // pred_check_branch
      %862 = sbr.rel (0) target = $region37
    $region36: #{tpu_custom_call.1} parent=1 // pred_region
      %s864 = ssub.s32 256, 256
      %865 = vsyncadd [#allocation4], %s864
      %s866 = sshll.u32 [#allocation10], 4
      %s867 = int_to_ptr.vmem [resolvable:$true] %s866
      %872 = dma.vmem_to_hbm [thread:$0]  %s867, 256, %s4, [#allocation4], 128, 128, 8
    $region37: #{tpu_custom_call.1} parent=1 // pred_fallthru
      _
    // Predicated region
    $region38: #{tpu_custom_call.1} parent=1 // pred_check
      _
    $region39: #{tpu_custom_call.1} parent=1 // pred_check_branch
      %874 = sbr.rel (0) target = $region41
    $region40: #{tpu_custom_call.1} parent=1 // pred_region
      %875 = dma.done [#allocation4], 256
    $region41: #{tpu_custom_call.1} parent=1 // pred_fallthru
      _
    %876 = vsyncpa [#allocation3], 1
    %877 = vsyncpa [#allocation6], 1
    %878 = vsyncpa [#allocation9], 1
    %879 = vsyncpa [#allocation4], 1

</llo_original>
